<compile_context>
chip_gen: v7x
topology: tpu7x:2x2x1
jax: 0.10.0
libtpu: 0.0.40
codegen_flags: <defaults>
</compile_context>

<pallas_src>
import jax
import jax.numpy as jnp
from jax import lax
from jax.experimental import pallas as pl
from jax.experimental.pallas import tpu as pltpu


def encoding_shake_kernel(x_ref, scw_ref, cw_ref, s_ref, out_ref,
                          m_acc, l_acc, ex_acc):
    # x_ref:   (D, TN)  one N-tile of one batch element, channel-major
    # scw_ref: (K, D)   2 * scale[:,None] * codewords  (precomputed)
    # cw_ref:  (K, D)   codewords
    # s_ref:   (K, 1)   scale
    # out_ref: (K, D)   aggregated encoding for this batch element
    # m_acc:   (K, 1) f32 running max        (online softmax)
    # l_acc:   (K, 1) f32 running denominator
    # ex_acc:  (K, D) f32 running unnormalized aggregation  sum_i p[k,i]*x[i,d]
    n = pl.program_id(1)

    @pl.when(n == 0)
    def _():
        m_acc[...] = jnp.full_like(m_acc, -jnp.inf)
        l_acc[...] = jnp.zeros_like(l_acc)
        ex_acc[...] = jnp.zeros_like(ex_acc)

    x = x_ref[...]                                         # (D, TN), native dtype
    xf = x.astype(jnp.float32)
    s = s_ref[...].astype(jnp.float32)                     # (K, 1)

    # scaled-L2 logits over this tile (constant s_k*||c_k||^2 term dropped:
    # it cancels in the softmax over N).
    x_sq = jnp.sum(xf * xf, axis=0, keepdims=True)         # (1, TN)
    cx = lax.dot_general(scw_ref[...], x,                  # (K, TN) = (2*s*c) @ x
                         (((1,), (0,)), ((), ())),
                         preferred_element_type=jnp.float32)
    sl = s * x_sq - cx                                     # (K, TN)

    # online softmax over N (lane axis), normalization deferred
    tile_max = jnp.max(sl, axis=-1, keepdims=True)         # (K, 1)
    m_new = jnp.maximum(m_acc[...], tile_max)
    alpha = jnp.exp(m_acc[...] - m_new)                    # (K, 1)
    p = jnp.exp(sl - m_new)                                # (K, TN)
    l_acc[...] = alpha * l_acc[...] + jnp.sum(p, axis=-1, keepdims=True)
    ex_acc[...] = alpha * ex_acc[...] + lax.dot_general(
        p.astype(x.dtype), x,                              # (K, D) = p @ x^T
        (((1,), (1,)), ((), ())),
        preferred_element_type=jnp.float32)
    m_acc[...] = m_new

    @pl.when(n == pl.num_programs(1) - 1)
    def _():
        # softmax column sums over N are exactly 1, so sum_i A[i,k]*c[k,d] == c[k,d]
        inv_l = 1.0 / l_acc[...]                           # (K, 1), only K divides
        e = ex_acc[...] * inv_l - cw_ref[...].astype(jnp.float32)
        out_ref[...] = e.astype(out_ref.dtype)


def _pick_tile(n, cap=2048):
    """Largest multiple of 128 <= cap that divides N; else the full N."""
    if n % 128 != 0:
        return n
    tn = min(n, cap)
    tn -= tn % 128
    while n % tn != 0:
        tn -= 128
    return tn


def encoding_shake(x_nchw, codewords, scale, *, tn_cap=2048):
    """x_nchw: (B, D, H, W); codewords: (K, D); scale: (K,) -> E: (B, K, D)."""
    B, D, H, W = x_nchw.shape
    K, D2 = codewords.shape
    assert D == D2, "channel dim must equal D"
    N = H * W

    # free layout change: NCHW -> (B, D, N); no transpose, no extra HBM pass
    x_bdn = x_nchw.reshape(B, D, N)

    # hoisted codeword-only precompute (tiny: K*D)
    scw = (2.0 * scale[:, None] * codewords).astype(codewords.dtype)   # (K, D)
    s_col = scale.reshape(K, 1)

    TN = _pick_tile(N, tn_cap)
    nt = N // TN

    grid_spec = pltpu.PrefetchScalarGridSpec(
        num_scalar_prefetch=0,
        grid=(B, nt),
        in_specs=[
            pl.BlockSpec((pl.Squeezed(), D, TN), lambda b, n: (b, 0, n)),  # x
            pl.BlockSpec((K, D), lambda b, n: (0, 0)),                     # 2*s*c
            pl.BlockSpec((K, D), lambda b, n: (0, 0)),                     # c
            pl.BlockSpec((K, 1), lambda b, n: (0, 0)),                     # s
        ],
        out_specs=pl.BlockSpec((pl.Squeezed(), K, D), lambda b, n: (b, 0, 0)),
        scratch_shapes=[
            pltpu.VMEM((K, 1), jnp.float32),   # running max
            pltpu.VMEM((K, 1), jnp.float32),   # running denominator
            pltpu.VMEM((K, D), jnp.float32),   # running unnormalized aggregation
        ],
    )

    return pl.pallas_call(
        encoding_shake_kernel,
        out_shape=jax.ShapeDtypeStruct((B, K, D), x_nchw.dtype),
        grid_spec=grid_spec,
        compiler_params=pltpu.CompilerParams(
            dimension_semantics=("parallel", "arbitrary")),
    )(x_bdn, scw, codewords, s_col)


def _reference(x_nchw, codewords, scale):
    """Pure-JAX reference of the PyTorch forward, for correctness check."""
    B, D, H, W = x_nchw.shape
    N = H * W
    X = jnp.transpose(x_nchw.reshape(B, D, N), (0, 2, 1))             # (B,N,D)
    diff = X[:, :, None, :] - codewords[None, None, :, :]             # (B,N,K,D)
    sl = scale[None, None, :] * jnp.sum(diff * diff, axis=-1)         # (B,N,K)
    A = jax.nn.softmax(sl, axis=1)                                    # softmax over N
    E = jnp.sum(A[..., None] * diff, axis=1)                          # (B,K,D)
    return E


if __name__ == "__main__":
    B, D, H, W = 2, 4, 16, 16
    K = 8

    key = jax.random.PRNGKey(0)
    kx, kc = jax.random.split(key)

    x = jax.random.normal(kx, (B, D, H, W), dtype=jnp.float32)

    # deterministic parameter init (mirrors reset_params shapes/ranges)
    std1 = 1.0 / (K * D) ** 0.5
    codewords = jax.random.uniform(
        kc, (K, D), minval=-std1, maxval=std1, dtype=jnp.float32)
    # shake() in eval mode: scale.zero_().add_(-0.5)
    scale = jnp.full((K,), -0.5, dtype=jnp.float32)

    out = encoding_shake(x, codewords, scale)
    out = jax.block_until_ready(out)

    ref = _reference(x, codewords, scale)
    assert out.shape == (B, K, D)
    assert jnp.allclose(out, ref, atol=1e-4, rtol=1e-4), "mismatch vs reference"

    print("KERNEL_OK")
</pallas_src>

<mosaic_0001>
module attributes {stable_mosaic.version = 11 : i64} {
  func.func @encoding_shake_kernel(%arg0: i32, %arg1: i32, %arg2: memref<1x4x256xf32, #tpu.memory_space<vmem>>, %arg3: memref<8x4xf32, #tpu.memory_space<vmem>>, %arg4: memref<8x4xf32, #tpu.memory_space<vmem>>, %arg5: memref<8x1xf32, #tpu.memory_space<vmem>>, %arg6: memref<1x8x4xf32, #tpu.memory_space<vmem>>, %arg7: memref<8x1xf32, #tpu.memory_space<vmem>>, %arg8: memref<8x1xf32, #tpu.memory_space<vmem>>, %arg9: memref<8x4xf32, #tpu.memory_space<vmem>>) attributes {dimension_semantics = [#tpu.dimension_semantics<parallel>, #tpu.dimension_semantics<arbitrary>], iteration_bounds = array<i64: 2, 1>, scalar_prefetch = 0 : i64, scratch_operands = 3 : i64, tpu.core_type = #tpu.core_type<tc>, window_params = [{transform_indices = @transform_0, window_bounds = array<i64: 1, 4, 256>}, {pipeline_mode = #tpu.pipeline_mode<synchronous>, transform_indices = @transform_1, window_bounds = array<i64: 8, 4>}, {pipeline_mode = #tpu.pipeline_mode<synchronous>, transform_indices = @transform_2, window_bounds = array<i64: 8, 4>}, {pipeline_mode = #tpu.pipeline_mode<synchronous>, transform_indices = @transform_3, window_bounds = array<i64: 8, 1>}, {transform_indices = @transform_4, window_bounds = array<i64: 1, 8, 4>}]} {
    %c0_i32 = arith.constant 0 : i32
    %0 = arith.cmpi eq, %arg1, %c0_i32 : i32
    %1 = arith.extui %0 : i1 to i32
    %c0_i32_0 = arith.constant 0 : i32
    %2 = arith.cmpi ne, %1, %c0_i32_0 : i32
    scf.if %2 {
      %cst_27 = arith.constant 0xFF800000 : f32
      %41 = vector.broadcast %cst_27 : f32 to vector<8x1xf32>
      %c0_28 = arith.constant 0 : index
      %c0_29 = arith.constant 0 : index
      %42 = vector.load %arg7[%c0_28, %c0_29] : memref<8x1xf32, #tpu.memory_space<vmem>>, vector<8x1xf32>
      tpu.vector_store %arg7[%c0_28, %c0_29], %41 {strides = array<i32>} : memref<8x1xf32, #tpu.memory_space<vmem>>, vector<8x1xf32>,
      %cst_30 = arith.constant 0.000000e+00 : f32
      %43 = vector.broadcast %cst_30 : f32 to vector<8x1xf32>
      %c0_31 = arith.constant 0 : index
      %c0_32 = arith.constant 0 : index
      %44 = vector.load %arg8[%c0_31, %c0_32] : memref<8x1xf32, #tpu.memory_space<vmem>>, vector<8x1xf32>
      tpu.vector_store %arg8[%c0_31, %c0_32], %43 {strides = array<i32>} : memref<8x1xf32, #tpu.memory_space<vmem>>, vector<8x1xf32>,
      %cst_33 = arith.constant 0.000000e+00 : f32
      %45 = vector.broadcast %cst_33 : f32 to vector<8x4xf32>
      %c0_34 = arith.constant 0 : index
      %c0_35 = arith.constant 0 : index
      %46 = vector.load %arg9[%c0_34, %c0_35] : memref<8x4xf32, #tpu.memory_space<vmem>>, vector<8x4xf32>
      tpu.vector_store %arg9[%c0_34, %c0_35], %45 {strides = array<i32>} : memref<8x4xf32, #tpu.memory_space<vmem>>, vector<8x4xf32>,
    } else {
    }
    %c0 = arith.constant 0 : index
    %c0_1 = arith.constant 0 : index
    %c0_2 = arith.constant 0 : index
    %3 = vector.load %arg2[%c0, %c0_1, %c0_2] : memref<1x4x256xf32, #tpu.memory_space<vmem>>, vector<1x4x256xf32>
    %4 = vector.shape_cast %3 : vector<1x4x256xf32> to vector<4x256xf32>
    %c0_3 = arith.constant 0 : index
    %c0_4 = arith.constant 0 : index
    %5 = vector.load %arg5[%c0_3, %c0_4] : memref<8x1xf32, #tpu.memory_space<vmem>>, vector<8x1xf32>
    %6 = arith.mulf %4, %4 : vector<4x256xf32>
    %cst = arith.constant dense<0.000000e+00> : vector<256xf32>
    %7 = vector.multi_reduction <add>, %6, %cst [0] : vector<4x256xf32> to vector<256xf32>
    %8 = vector.shape_cast %7 : vector<256xf32> to vector<1x256xf32>
    %c0_5 = arith.constant 0 : index
    %c0_6 = arith.constant 0 : index
    %9 = vector.load %arg3[%c0_5, %c0_6] : memref<8x4xf32, #tpu.memory_space<vmem>>, vector<8x4xf32>
    %cst_7 = arith.constant dense<0.000000e+00> : vector<8x256xf32>
    %10 = tpu.matmul %9, %4, %cst_7 {dimension_numbers = #tpu.dot_dimension_numbers<[1], [0], [0], [1], [0, 0, 1, 1], [], []>} : vector<8x4xf32>, vector<4x256xf32>, vector<8x256xf32> -> vector<8x256xf32>
    %11 = vector.broadcast %5 : vector<8x1xf32> to vector<8x256xf32>
    %12 = vector.broadcast %8 : vector<1x256xf32> to vector<8x256xf32>
    %13 = arith.mulf %11, %12 : vector<8x256xf32>
    %14 = arith.subf %13, %10 : vector<8x256xf32>
    %cst_8 = arith.constant dense<0xFF800000> : vector<8xf32>
    %15 = vector.multi_reduction <maximumf>, %14, %cst_8 [1] : vector<8x256xf32> to vector<8xf32>
    %16 = vector.shape_cast %15 : vector<8xf32> to vector<8x1xf32>
    %c0_9 = arith.constant 0 : index
    %c0_10 = arith.constant 0 : index
    %17 = vector.load %arg7[%c0_9, %c0_10] : memref<8x1xf32, #tpu.memory_space<vmem>>, vector<8x1xf32>
    %18 = arith.maximumf %17, %16 : vector<8x1xf32>
    %c0_11 = arith.constant 0 : index
    %c0_12 = arith.constant 0 : index
    %19 = vector.load %arg7[%c0_11, %c0_12] : memref<8x1xf32, #tpu.memory_space<vmem>>, vector<8x1xf32>
    %20 = arith.subf %19, %18 : vector<8x1xf32>
    %21 = math.exp %20 : vector<8x1xf32>
    %22 = vector.broadcast %18 : vector<8x1xf32> to vector<8x256xf32>
    %23 = arith.subf %14, %22 : vector<8x256xf32>
    %24 = math.exp %23 : vector<8x256xf32>
    %c0_13 = arith.constant 0 : index
    %c0_14 = arith.constant 0 : index
    %25 = vector.load %arg8[%c0_13, %c0_14] : memref<8x1xf32, #tpu.memory_space<vmem>>, vector<8x1xf32>
    %26 = arith.mulf %21, %25 : vector<8x1xf32>
    %cst_15 = arith.constant dense<0.000000e+00> : vector<8xf32>
    %27 = vector.multi_reduction <add>, %24, %cst_15 [1] : vector<8x256xf32> to vector<8xf32>
    %28 = vector.shape_cast %27 : vector<8xf32> to vector<8x1xf32>
    %29 = arith.addf %26, %28 : vector<8x1xf32>
    %c0_16 = arith.constant 0 : index
    %c0_17 = arith.constant 0 : index
    %30 = vector.load %arg8[%c0_16, %c0_17] : memref<8x1xf32, #tpu.memory_space<vmem>>, vector<8x1xf32>
    tpu.vector_store %arg8[%c0_16, %c0_17], %29 {strides = array<i32>} : memref<8x1xf32, #tpu.memory_space<vmem>>, vector<8x1xf32>,
    %c0_18 = arith.constant 0 : index
    %c0_19 = arith.constant 0 : index
    %31 = vector.load %arg9[%c0_18, %c0_19] : memref<8x4xf32, #tpu.memory_space<vmem>>, vector<8x4xf32>
    %32 = vector.broadcast %21 : vector<8x1xf32> to vector<8x4xf32>
    %33 = arith.mulf %32, %31 : vector<8x4xf32>
    %cst_20 = arith.constant dense<0.000000e+00> : vector<8x4xf32>
    %34 = tpu.matmul %24, %4, %cst_20 {dimension_numbers = #tpu.dot_dimension_numbers<[1], [1], [0], [0], [0, 0, 1, 0], [], []>} : vector<8x256xf32>, vector<4x256xf32>, vector<8x4xf32> -> vector<8x4xf32>
    %35 = arith.addf %33, %34 : vector<8x4xf32>
    %c0_21 = arith.constant 0 : index
    %c0_22 = arith.constant 0 : index
    %36 = vector.load %arg9[%c0_21, %c0_22] : memref<8x4xf32, #tpu.memory_space<vmem>>, vector<8x4xf32>
    tpu.vector_store %arg9[%c0_21, %c0_22], %35 {strides = array<i32>} : memref<8x4xf32, #tpu.memory_space<vmem>>, vector<8x4xf32>,
    %c0_23 = arith.constant 0 : index
    %c0_24 = arith.constant 0 : index
    %37 = vector.load %arg7[%c0_23, %c0_24] : memref<8x1xf32, #tpu.memory_space<vmem>>, vector<8x1xf32>
    tpu.vector_store %arg7[%c0_23, %c0_24], %18 {strides = array<i32>} : memref<8x1xf32, #tpu.memory_space<vmem>>, vector<8x1xf32>,
    %c0_i32_25 = arith.constant 0 : i32
    %38 = arith.cmpi eq, %arg1, %c0_i32_25 : i32
    %39 = arith.extui %38 : i1 to i32
    %c0_i32_26 = arith.constant 0 : i32
    %40 = arith.cmpi ne, %39, %c0_i32_26 : i32
    scf.if %40 {
      %c0_27 = arith.constant 0 : index
      %c0_28 = arith.constant 0 : index
      %41 = vector.load %arg8[%c0_27, %c0_28] : memref<8x1xf32, #tpu.memory_space<vmem>>, vector<8x1xf32>
      %cst_29 = arith.constant 1.000000e+00 : f32
      %42 = vector.broadcast %cst_29 : f32 to vector<8x1xf32>
      %43 = arith.divf %42, %41 : vector<8x1xf32>
      %c0_30 = arith.constant 0 : index
      %c0_31 = arith.constant 0 : index
      %44 = vector.load %arg9[%c0_30, %c0_31] : memref<8x4xf32, #tpu.memory_space<vmem>>, vector<8x4xf32>
      %45 = vector.broadcast %43 : vector<8x1xf32> to vector<8x4xf32>
      %46 = arith.mulf %44, %45 : vector<8x4xf32>
      %c0_32 = arith.constant 0 : index
      %c0_33 = arith.constant 0 : index
      %47 = vector.load %arg4[%c0_32, %c0_33] : memref<8x4xf32, #tpu.memory_space<vmem>>, vector<8x4xf32>
      %48 = arith.subf %46, %47 : vector<8x4xf32>
      %c0_34 = arith.constant 0 : index
      %c0_35 = arith.constant 0 : index
      %c0_36 = arith.constant 0 : index
      %49 = vector.load %arg6[%c0_34, %c0_35, %c0_36] : memref<1x8x4xf32, #tpu.memory_space<vmem>>, vector<1x8x4xf32>
      %50 = vector.shape_cast %49 : vector<1x8x4xf32> to vector<8x4xf32>
      %51 = vector.shape_cast %48 : vector<8x4xf32> to vector<1x8x4xf32>
      tpu.vector_store %arg6[%c0_34, %c0_35, %c0_36], %51 {strides = array<i32>} : memref<1x8x4xf32, #tpu.memory_space<vmem>>, vector<1x8x4xf32>,
    } else {
    }
    return
  }
  func.func @transform_0(%arg0: i32, %arg1: i32) -> (i32, i32, i32) {
    %c0_i32 = arith.constant 0 : i32
    %c0_i32_0 = arith.constant 0 : i32
    return %arg0, %c0_i32, %arg1 : i32, i32, i32
  }
  func.func @transform_1(%arg0: i32, %arg1: i32) -> (i32, i32) {
    %c0_i32 = arith.constant 0 : i32
    %c0_i32_0 = arith.constant 0 : i32
    %c0_i32_1 = arith.constant 0 : i32
    return %c0_i32, %c0_i32_0 : i32, i32
  }
  func.func @transform_2(%arg0: i32, %arg1: i32) -> (i32, i32) {
    %c0_i32 = arith.constant 0 : i32
    %c0_i32_0 = arith.constant 0 : i32
    %c0_i32_1 = arith.constant 0 : i32
    return %c0_i32, %c0_i32_0 : i32, i32
  }
  func.func @transform_3(%arg0: i32, %arg1: i32) -> (i32, i32) {
    %c0_i32 = arith.constant 0 : i32
    %c0_i32_0 = arith.constant 0 : i32
    %c0_i32_1 = arith.constant 0 : i32
    return %c0_i32, %c0_i32_0 : i32, i32
  }
  func.func @transform_4(%arg0: i32, %arg1: i32) -> (i32, i32, i32) {
    %c0_i32 = arith.constant 0 : i32
    %c0_i32_0 = arith.constant 0 : i32
    %c0_i32_1 = arith.constant 0 : i32
    return %arg0, %c0_i32, %c0_i32_0 : i32, i32, i32
  }
}

</mosaic_0001>

<llo_original>
// kernel: tpu_custom_call.1
$region0: #{tpu_custom_call.1}
  #allocation0 [shape = 'u32[]', space=smem, size = 0x4, offset = 0x4, fixed_abs, tag = 'smem constant byte address 0x4 - core index']
  #allocation1 [shape = 'u32[144,128]{1,0:T(1,128)}', space=vmem, size = 0x12000, scoped, tag = 'internal scratch']
  #allocation2 [shape = 'f32[8,1]{1,0:T(8,128)}', space=vmem, size = 0x1000, scoped, tag = 'scratch operand']
  #allocation3 [shape = 'f32[8,1]{1,0:T(8,128)}', space=vmem, size = 0x1000, scoped, tag = 'scratch operand']
  #allocation4 [shape = 'f32[8,4]{1,0:T(8,128)}', space=vmem, size = 0x1000, scoped, tag = 'scratch operand']
  %s0 = inlined_call_operand.vmem [shape: f32[2,4,256], index: 0, kind: input, shape index: {}]
  %s1 = inlined_call_operand.vmem [shape: f32[8,4], index: 1, kind: input, shape index: {}]
  %s2 = inlined_call_operand.vmem [shape: f32[8,4], index: 2, kind: input, shape index: {}]
  %s3 = inlined_call_operand.vmem [shape: f32[8,1], index: 3, kind: input, shape index: {}]
  %s4 = inlined_call_operand.vmem [shape: f32[2,8,4], index: 4, kind: output, shape index: {}]
  %s5 = sld [smem:[#allocation0]]
  $region57: #{tpu_custom_call.1} parent=0
    _
  %s7 = ssub.s32 1, %s5
  %s8 = scalar_select 0, %s7, %s5
  loop: start=0, step=1, limit=4
  $region2: #{tpu_custom_call.1} parent=0 // loop_pre_header
    _
  $region3: #{tpu_custom_call.1} parent=0 // loop_header
    %s10 = sphi 0, %s14
    %p11 = scmp.ge.s32.totalorder %s10, 4
    %s17 = sphi 0, %s29
    %s18 = sphi 0, %s25
    %s19 = sphi 0, %s17
    %s20 = sphi 0, %s18
    %s21 = sphi 0, %s19
    %s22 = sphi 0, %s20
    %s34 = sphi 0, %s36
    %s37 = sphi 0, %s34
    %s38 = sphi 0, %s37
    %s54 = sphi 0, %s38
    %s58 = sphi 0, %s58
    %s60 = sphi 0, %s58
    %s61 = sphi 0, %s60
    %s75 = sphi 0, %s61
    %s79 = sphi 0, %s79
    %s81 = sphi 0, %s79
    %s82 = sphi 0, %s81
    %s96 = sphi 0, %s82
    %s100 = sphi 0, %s100
    %s102 = sphi 0, %s100
    %s103 = sphi 0, %s102
    %s117 = sphi 0, %s103
    %s123 = sphi 0, %s125
    %s126 = sphi 0, %s123
    %s127 = sphi 0, %s126
    %s143 = sphi 0, %s127
  $region4: #{tpu_custom_call.1} parent=0 // loop_header_branch
    %13 = sbr.rel (%p11) target = $region8
  $region5: #{tpu_custom_call.1} parent=0 // loop_body
    %s15 = ssub.s32 %s10, 1
    %s16 = ssub.s32 %s10, 2
    %s23 = sadd.s32 1, %s18
    %p24 = scmp.ge.s32.totalorder %s23, 1
    %s25 = scalar_select %p24, 0, %s23
    %s26 = sadd.s32 1, %s17
    %s27 = scalar_select %p24, %s26, %s17
    %p28 = scmp.ge.s32.totalorder %s27, 2
    %s29 = scalar_select %p28, 0, %s27
    %s30 = ssub.s32 %s17, %s29
    %s31 = ssub.s32 %s18, %s25
    %s32 = sor.u32 %s30, %s31
    %p33 = scmp.eq.s32.totalorder %s32, 0
    %s35 = sadd.s32 %s34, 1
    %s36 = scalar_select %p33, %s34, %s35
    %p39 = pneg %p33
    %p40 = scmp.eq.s32.totalorder %s10, 1
    %p41 = por %p39, %p40
    %p42 = scmp.ne.s32.totalorder %s34, %s37
    %p43 = scmp.eq.s32.totalorder %s10, 0
    %p44 = por %p42, %p43
    %p45 = scmp.ne.s32.totalorder %s34, %s37
    %p46 = scmp.eq.s32.totalorder %s15, 1
    %p47 = por %p45, %p46
    %p48 = scmp.ne.s32.totalorder %s37, %s38
    %p49 = scmp.eq.s32.totalorder %s15, 0
    %p50 = por %p48, %p49
    %p51 = scmp.ne.s32.totalorder %s37, %s38
    %p52 = scmp.eq.s32.totalorder %s16, 1
    %p53 = por %p51, %p52
    %p55 = scmp.ne.s32.totalorder %s38, %s54
    %p56 = scmp.eq.s32.totalorder %s16, 0
    %p57 = por %p55, %p56
    %s59 = sadd.s32 %s58, 1
    %p62 = scmp.eq.s32.totalorder %s10, 1
    %p63 = scmp.ne.s32.totalorder %s58, %s60
    %p64 = scmp.eq.s32.totalorder %s10, 0
    %p65 = por %p63, %p64
    %p66 = scmp.ne.s32.totalorder %s58, %s60
    %p67 = scmp.eq.s32.totalorder %s15, 1
    %p68 = por %p66, %p67
    %p69 = scmp.ne.s32.totalorder %s60, %s61
    %p70 = scmp.eq.s32.totalorder %s15, 0
    %p71 = por %p69, %p70
    %p72 = scmp.ne.s32.totalorder %s60, %s61
    %p73 = scmp.eq.s32.totalorder %s16, 1
    %p74 = por %p72, %p73
    %p76 = scmp.ne.s32.totalorder %s61, %s75
    %p77 = scmp.eq.s32.totalorder %s16, 0
    %p78 = por %p76, %p77
    %s80 = sadd.s32 %s79, 1
    %p83 = scmp.eq.s32.totalorder %s10, 1
    %p84 = scmp.ne.s32.totalorder %s79, %s81
    %p85 = scmp.eq.s32.totalorder %s10, 0
    %p86 = por %p84, %p85
    %p87 = scmp.ne.s32.totalorder %s79, %s81
    %p88 = scmp.eq.s32.totalorder %s15, 1
    %p89 = por %p87, %p88
    %p90 = scmp.ne.s32.totalorder %s81, %s82
    %p91 = scmp.eq.s32.totalorder %s15, 0
    %p92 = por %p90, %p91
    %p93 = scmp.ne.s32.totalorder %s81, %s82
    %p94 = scmp.eq.s32.totalorder %s16, 1
    %p95 = por %p93, %p94
    %p97 = scmp.ne.s32.totalorder %s82, %s96
    %p98 = scmp.eq.s32.totalorder %s16, 0
    %p99 = por %p97, %p98
    %s101 = sadd.s32 %s100, 1
    %p104 = scmp.eq.s32.totalorder %s10, 1
    %p105 = scmp.ne.s32.totalorder %s100, %s102
    %p106 = scmp.eq.s32.totalorder %s10, 0
    %p107 = por %p105, %p106
    %p108 = scmp.ne.s32.totalorder %s100, %s102
    %p109 = scmp.eq.s32.totalorder %s15, 1
    %p110 = por %p108, %p109
    %p111 = scmp.ne.s32.totalorder %s102, %s103
    %p112 = scmp.eq.s32.totalorder %s15, 0
    %p113 = por %p111, %p112
    %p114 = scmp.ne.s32.totalorder %s102, %s103
    %p115 = scmp.eq.s32.totalorder %s16, 1
    %p116 = por %p114, %p115
    %p118 = scmp.ne.s32.totalorder %s103, %s117
    %p119 = scmp.eq.s32.totalorder %s16, 0
    %p120 = por %p118, %p119
    %s121 = ssub.s32 %s17, %s29
    %p122 = scmp.eq.s32.totalorder %s121, 0
    %s124 = sadd.s32 %s123, 1
    %s125 = scalar_select %p122, %s123, %s124
    %p128 = pneg %p122
    %p129 = scmp.eq.s32.totalorder %s10, 1
    %p130 = por %p128, %p129
    %p131 = scmp.ne.s32.totalorder %s123, %s126
    %p132 = scmp.eq.s32.totalorder %s10, 0
    %p133 = por %p131, %p132
    %p134 = scmp.ne.s32.totalorder %s123, %s126
    %p135 = scmp.eq.s32.totalorder %s15, 1
    %p136 = por %p134, %p135
    %p137 = scmp.ne.s32.totalorder %s126, %s127
    %p138 = scmp.eq.s32.totalorder %s15, 0
    %p139 = por %p137, %p138
    %p140 = scmp.ne.s32.totalorder %s126, %s127
    %p141 = scmp.eq.s32.totalorder %s16, 1
    %p142 = por %p140, %p141
    %p144 = scmp.ne.s32.totalorder %s127, %s143
    %p145 = scmp.eq.s32.totalorder %s16, 0
    %p146 = por %p144, %p145
    %p147 = scmp.le.s32.totalorder 1, %s10
    %p148 = scmp.lt.s32.totalorder %s10, 3
    %p149 = pnand %p147, %p148
    %p150 = pneg %p149
    // Predicated region
    $region9: #{tpu_custom_call.1} parent=5 // pred_check
      _
    $region10: #{tpu_custom_call.1} parent=5 // pred_check_branch
      %152 = sbr.rel (%p149) target = $region12
    $region11: #{tpu_custom_call.1} parent=5 // pred_region
      %s153 = ssub.s32 %s10, 1
      // Predicated region
      $region13: #{tpu_custom_call.1} parent=11 // pred_check
        %p154 = pneg %p71
      $region14: #{tpu_custom_call.1} parent=11 // pred_check_branch
        %156 = sbr.rel (%p154) target = $region16
      $region15: #{tpu_custom_call.1} parent=11 // pred_region
        _
      $region16: #{tpu_custom_call.1} parent=11 // pred_fallthru
        _
      // Predicated region
      $region17: #{tpu_custom_call.1} parent=11 // pred_check
        %p157 = pneg %p92
      $region18: #{tpu_custom_call.1} parent=11 // pred_check_branch
        %159 = sbr.rel (%p157) target = $region20
      $region19: #{tpu_custom_call.1} parent=11 // pred_region
        _
      $region20: #{tpu_custom_call.1} parent=11 // pred_fallthru
        _
      // Predicated region
      $region21: #{tpu_custom_call.1} parent=11 // pred_check
        %p160 = pneg %p113
      $region22: #{tpu_custom_call.1} parent=11 // pred_check_branch
        %162 = sbr.rel (%p160) target = $region24
      $region23: #{tpu_custom_call.1} parent=11 // pred_region
        _
      $region24: #{tpu_custom_call.1} parent=11 // pred_fallthru
        _
    $region12: #{tpu_custom_call.1} parent=5 // pred_fallthru
      _
    %p163 = scmp.lt.s32.totalorder %s10, 2
    // Predicated region
    $region25: #{tpu_custom_call.1} parent=5 // pred_check
      %p164 = pneg %p163
    $region26: #{tpu_custom_call.1} parent=5 // pred_check_branch
      %166 = sbr.rel (%p164) target = $region28
    $region27: #{tpu_custom_call.1} parent=5 // pred_region
      // Predicated region
      $region29: #{tpu_custom_call.1} parent=27 // pred_check
        %p167 = pneg %p44
      $region30: #{tpu_custom_call.1} parent=27 // pred_check_branch
        %169 = sbr.rel (%p167) target = $region32
      $region31: #{tpu_custom_call.1} parent=27 // pred_region
        %s170 = smul.u32 2, %s18
        %p171 = scmp.lt.s32.totalorder %s17, 1
        %s172 = scalar_select %p171, %s17, 1
        %p173 = scmp.lt.s32.totalorder %s170, 1
        %s174 = scalar_select %p173, %s170, 1
        %s175 = smul.addr %s172, 2
        %s176 = sadd.s32 %s174, %s175
        %s177 = smul.addr %s176, 4
        %s178 = scalar_lea.vmem %s0, %s177
        %s179 = smul.u32 2, %s18
      $region32: #{tpu_custom_call.1} parent=27 // pred_fallthru
        _
    $region28: #{tpu_custom_call.1} parent=5 // pred_fallthru
      _
    %p180 = scmp.le.s32.totalorder 1, %s10
    %p181 = scmp.lt.s32.totalorder %s10, 3
    %p182 = pnand %p180, %p181
    %p183 = pneg %p182
    // Predicated region
    $region33: #{tpu_custom_call.1} parent=5 // pred_check
      _
    $region34: #{tpu_custom_call.1} parent=5 // pred_check_branch
      %185 = sbr.rel (%p182) target = $region36
    $region35: #{tpu_custom_call.1} parent=5 // pred_region
      %s186 = ssub.s32 %s10, 1
      %s187 = smul.u32 2, %s20
      %p188 = scmp.lt.s32.totalorder %s19, 1
      %s189 = scalar_select %p188, %s19, 1
      %p190 = scmp.lt.s32.totalorder %s187, 1
      %s191 = scalar_select %p190, %s187, 1
      %s192 = smul.addr %s189, 2
      %s193 = sadd.s32 %s191, %s192
      %s194 = smul.addr %s193, 4
      %s195 = scalar_lea.vmem %s0, %s194
      %p196 = pneg %p50
      %p197 = pneg %p47
      %p198 = pneg %p71
      %p199 = pneg %p68
      %p200 = pneg %p92
      %p201 = pneg %p89
      %p202 = pneg %p113
      %p203 = pneg %p110
      %p204 = pneg %p139
      %p205 = pneg %p136
      %p206 = scmp.lt.s32.totalorder %s19, 1
      %s207 = scalar_select %p206, %s19, 1
      %s208 = smul.addr %s207, 8
      %s209 = scalar_lea.vmem %s4, %s208
      %s210 = smul.u32 2, %s20
      %p211 = scmp.lt.s32.totalorder %s19, 1
      %s212 = scalar_select %p211, %s19, 1
      %p213 = scmp.lt.s32.totalorder %s210, 1
      %s214 = scalar_select %p213, %s210, 1
      %s215 = smul.addr %s212, 2
      %s216 = sadd.s32 %s214, %s215
      %s217 = smul.addr %s216, 4
      %s218 = scalar_lea.vmem %s0, %s217
      %s219 = smul.u32 2, %s20
      %p220 = scmp.lt.s32.totalorder %s19, 1
      %s221 = scalar_select %p220, %s19, 1
      %s222 = smul.addr %s221, 8
      %s223 = scalar_lea.vmem %s4, %s222
      %p224 = scmp.eq.s32.totalorder %s20, 0
      // Predicated region
      $region37: #{tpu_custom_call.1} parent=35 // pred_check
        %p225 = pneg %p224
      $region38: #{tpu_custom_call.1} parent=35 // pred_check_branch
        %227 = sbr.rel (%p225) target = $region40
      $region39: #{tpu_custom_call.1} parent=35 // pred_region
        %vm228 = vcmask 7168
        %229 = vst.msk [vmem:[#allocation2] sm:$0xff] %vm228, -inf
        %230 = vst.msk [vmem:[#allocation3] sm:$0xff] %vm228, 0.0
        %vm231 = vcmask 31744
        %232 = vst.msk [vmem:[#allocation4] sm:$0xff] %vm231, 0.0
      $region40: #{tpu_custom_call.1} parent=35 // pred_fallthru
        _
      %v233 = vld [vmem:[%s218] sm:$0xff]
      %v234 = vld [vmem:[%s3] sm:$0xff]
      %v235 = vmul.f32 %v233, %v233
      %v237 = vcombine.high %v235, %v235
      %vm239 = vcmask 1043456
      %v240 = vsel %vm239, %v235, 0.0
      %v241 = vrot.slane %v240, 4
      %v242 = vadd.f32 %v240, %v241
      %v243 = vrot.slane %v242, 2
      %v244 = vadd.f32 %v242, %v243
      %v245 = vrot.slane %v244, 1
      %v246 = vadd.f32 %v244, %v245
      %v247 = vsel %vm239, %v237, 0.0
      %v248 = vrot.slane %v247, 4
      %v249 = vadd.f32 %v247, %v248
      %v250 = vrot.slane %v249, 2
      %v251 = vadd.f32 %v249, %v250
      %v252 = vrot.slane %v251, 1
      %v253 = vadd.f32 %v251, %v252
      %v254 = vld [vmem:[%s1] sm:$0xff]
      %v256 = vcombine.high %v233, %v233
      %vm257 = vcmask 31744
      %v259 = vsel %vm257, %v254, 0
      %v261 = vsel %vm239, %v233, 0
      %v263 = vsel %vm239, %v256, 0
      %265 = vmatprep.subr.mxu0 %v263
      %266 = vmatpush1.msra.mxu0 %v261
      %267 = vmatprep.subr.mxu0 0.0
      %268 = vmatpush1.msra.mxu0 0.0
      %269 = vmatprep.subr.mxu0 0.0
      %270 = vmatpush1.msra.mxu0 0.0
      %271 = vmatprep.subr.mxu0 0.0
      %272 = vmatpush1.msra.mxu0 0.0
      %273 = vmatprep.subr.mxu0 0.0
      %274 = vmatpush1.msra.mxu0 0.0
      %275 = vmatprep.subr.mxu0 0.0
      %276 = vmatpush1.msra.mxu0 0.0
      %277 = vmatprep.subr.mxu0 0.0
      %278 = vmatpush1.msra.mxu0 0.0
      %279 = vmatprep.subr.mxu0 0.0
      %280 = vmatpush1.msra.mxu0 0.0
      %281 = vmatprep.subr.mxu0 0.0
      %282 = vmatpush1.msra.mxu0 0.0
      %283 = vmatprep.subr.mxu0 0.0
      %284 = vmatpush1.msra.mxu0 0.0
      %285 = vmatprep.subr.mxu0 0.0
      %286 = vmatpush1.msra.mxu0 0.0
      %287 = vmatprep.subr.mxu0 0.0
      %288 = vmatpush1.msra.mxu0 0.0
      %289 = vmatprep.subr.mxu0 0.0
      %290 = vmatpush1.msra.mxu0 0.0
      %291 = vmatprep.subr.mxu0 0.0
      %292 = vmatpush1.msra.mxu0 0.0
      %293 = vmatprep.subr.mxu0 0.0
      %294 = vmatpush1.msra.mxu0 0.0
      %295 = vmatprep.subr.mxu0 0.0
      %296 = vmatpush1.msra.mxu0 0.0
      %297 = vmatprep.subr.mxu0 0.0
      %298 = vmatpush1.msra.mxu0 0.0
      %299 = vmatprep.subr.mxu0 0.0
      %300 = vmatpush1.msra.mxu0 0.0
      %301 = vmatprep.subr.mxu0 0.0
      %302 = vmatpush1.msra.mxu0 0.0
      %303 = vmatprep.subr.mxu0 0.0
      %304 = vmatpush1.msra.mxu0 0.0
      %305 = vmatprep.subr.mxu0 0.0
      %306 = vmatpush1.msra.mxu0 0.0
      %307 = vmatprep.subr.mxu0 0.0
      %308 = vmatpush1.msra.mxu0 0.0
      %309 = vmatprep.subr.mxu0 0.0
      %310 = vmatpush1.msra.mxu0 0.0
      %311 = vmatprep.subr.mxu0 0.0
      %312 = vmatpush1.msra.mxu0 0.0
      %313 = vmatprep.subr.mxu0 0.0
      %314 = vmatpush1.msra.mxu0 0.0
      %315 = vmatprep.subr.mxu0 0.0
      %316 = vmatpush1.msra.mxu0 0.0
      %317 = vmatprep.subr.mxu0 0.0
      %318 = vmatpush1.msra.mxu0 0.0
      %319 = vmatprep.subr.mxu0 0.0
      %320 = vmatpush1.msra.mxu0 0.0
      %321 = vmatprep.subr.mxu0 0.0
      %322 = vmatpush1.msra.mxu0 0.0
      %323 = vmatprep.subr.mxu0 0.0
      %324 = vmatpush1.msra.mxu0 0.0
      %325 = vmatprep.subr.mxu0 0.0
      %326 = vmatpush1.msra.mxu0 0.0
      %327 = vmatprep.subr.mxu0 0.0
      %328 = vmatpush1.msra.mxu0 0.0
      %329 = vmatprep.mubr.f32.mxu0 0.0
      %330 = vmatmul.mubr.f32.gmra.mrb[0].mxu0 %v259
      %v331 = vpop.f32.mrb[0].mxu0
      %v332 = vadd.f32 0.0, %v331
      %v333 = vpop.f32.mrb[0].mxu0
      %v334 = vadd.f32 0.0, %v333
      %335 = vdwg.mxu0
      %337 = vset.pattern.permute.xlu0 0
      %338 = vperm.xlu0 %337, %v234
      %v339 = vpop.permute.xlu0 %338
      %v341 = vmul.f32 %v339, %v246
      %v342 = vmul.f32 %v339, %v253
      %v343 = vsub.f32 %v341, %v332
      %v344 = vsub.f32 %v342, %v334
      %v345 = vmax.f32 %v343, %v344
      %346 = vmax.xlane.f32.xlu0 %v345
      %v347 = vpop.xlane.xlu0 %346
      %v348 = vld [vmem:[#allocation2] sm:$0xff]
      %v349 = vmax.f32 %v348, %v347
      %v350 = vsub.f32 %v348, %v349
      %v351 = vmul.f32 %v350, 1.442695
      %v352 = vpow.pop %v351
      %354 = vset.pattern.permute.xlu0 0
      %355 = vperm.xlu0 %354, %v349
      %v356 = vpop.permute.xlu0 %355
      %v358 = vsub.f32 %v343, %v356
      %v359 = vsub.f32 %v344, %v356
      %v360 = vmul.f32 %v358, 1.442695
      %v361 = vpow.pop %v360
      %v362 = vmul.f32 %v359, 1.442695
      %v363 = vpow.pop %v362
      %v364 = vld [vmem:[#allocation3] sm:$0xff]
      %v365 = vmul.f32 %v352, %v364
      %v366 = vadd.f32 %v361, %v363
      %367 = vadd.xlane.f32.xlu0 %v366
      %v368 = vpop.xlane.xlu0 %367
      %v369 = vadd.f32 %v365, %v368
      %vm370 = vcmask 7168
      %371 = vst.msk [vmem:[#allocation3] sm:$0xff] %vm370, %v369
      %v372 = vld [vmem:[#allocation4] sm:$0xff]
      %374 = vset.pattern.permute.xlu0 0
      %375 = vperm.xlu0 %374, %v352
      %v376 = vpop.permute.xlu0 %375
      %v378 = vmul.f32 %v376, %v372
      %380 = vmatprep.subr.mxu0 %v256
      %381 = vmatpush1.xpose.msra.mxu0 %v233
      %382 = vmatprep.subr.mxu0 0.0
      %383 = vmatpush1.xpose.msra.mxu0 0.0
      %384 = vmatprep.subr.mxu0 0.0
      %385 = vmatpush1.xpose.msra.mxu0 0.0
      %386 = vmatprep.subr.mxu0 0.0
      %387 = vmatpush1.xpose.msra.mxu0 0.0
      %388 = vmatprep.subr.mxu0 0.0
      %389 = vmatpush1.xpose.msra.mxu0 0.0
      %390 = vmatprep.subr.mxu0 0.0
      %391 = vmatpush1.xpose.msra.mxu0 0.0
      %392 = vmatprep.subr.mxu0 0.0
      %393 = vmatpush1.xpose.msra.mxu0 0.0
      %394 = vmatprep.subr.mxu0 0.0
      %395 = vmatpush1.xpose.msra.mxu0 0.0
      %396 = vmatprep.subr.mxu0 0.0
      %397 = vmatpush1.xpose.msra.mxu0 0.0
      %398 = vmatprep.subr.mxu0 0.0
      %399 = vmatpush1.xpose.msra.mxu0 0.0
      %400 = vmatprep.subr.mxu0 0.0
      %401 = vmatpush1.xpose.msra.mxu0 0.0
      %402 = vmatprep.subr.mxu0 0.0
      %403 = vmatpush1.xpose.msra.mxu0 0.0
      %404 = vmatprep.subr.mxu0 0.0
      %405 = vmatpush1.xpose.msra.mxu0 0.0
      %406 = vmatprep.subr.mxu0 0.0
      %407 = vmatpush1.xpose.msra.mxu0 0.0
      %408 = vmatprep.subr.mxu0 0.0
      %409 = vmatpush1.xpose.msra.mxu0 0.0
      %410 = vmatprep.subr.mxu0 0.0
      %411 = vmatpush1.xpose.msra.mxu0 0.0
      %412 = vmatprep.subr.mxu0 0.0
      %413 = vmatpush1.xpose.msra.mxu0 0.0
      %414 = vmatprep.subr.mxu0 0.0
      %415 = vmatpush1.xpose.msra.mxu0 0.0
      %416 = vmatprep.subr.mxu0 0.0
      %417 = vmatpush1.xpose.msra.mxu0 0.0
      %418 = vmatprep.subr.mxu0 0.0
      %419 = vmatpush1.xpose.msra.mxu0 0.0
      %420 = vmatprep.subr.mxu0 0.0
      %421 = vmatpush1.xpose.msra.mxu0 0.0
      %422 = vmatprep.subr.mxu0 0.0
      %423 = vmatpush1.xpose.msra.mxu0 0.0
      %424 = vmatprep.subr.mxu0 0.0
      %425 = vmatpush1.xpose.msra.mxu0 0.0
      %426 = vmatprep.subr.mxu0 0.0
      %427 = vmatpush1.xpose.msra.mxu0 0.0
      %428 = vmatprep.subr.mxu0 0.0
      %429 = vmatpush1.xpose.msra.mxu0 0.0
      %430 = vmatprep.subr.mxu0 0.0
      %431 = vmatpush1.xpose.msra.mxu0 0.0
      %432 = vmatprep.subr.mxu0 0.0
      %433 = vmatpush1.xpose.msra.mxu0 0.0
      %434 = vmatprep.subr.mxu0 0.0
      %435 = vmatpush1.xpose.msra.mxu0 0.0
      %436 = vmatprep.subr.mxu0 0.0
      %437 = vmatpush1.xpose.msra.mxu0 0.0
      %438 = vmatprep.subr.mxu0 0.0
      %439 = vmatpush1.xpose.msra.mxu0 0.0
      %440 = vmatprep.subr.mxu0 0.0
      %441 = vmatpush1.xpose.msra.mxu0 0.0
      %442 = vmatprep.subr.mxu0 0.0
      %443 = vmatpush1.xpose.msra.mxu0 0.0
      %444 = vmatprep.mubr.f32.mxu0 %v363
      %445 = vmatmul.mubr.f32.gmra.mrb[0].mxu0 %v361
      %v446 = vpop.f32.mrb[0].mxu0
      %v447 = vadd.f32 0.0, %v446
      %v448 = vpop.f32.mrb[0].mxu0
      %449 = vdwg.mxu0
      %v450 = vadd.f32 %v378, %v447
      %451 = vst.msk [vmem:[#allocation4] sm:$0xff] %vm257, %v450
      %452 = vst.msk [vmem:[#allocation2] sm:$0xff] %vm370, %v349
      // Predicated region
      $region41: #{tpu_custom_call.1} parent=35 // pred_check
        %p453 = pneg %p224
      $region42: #{tpu_custom_call.1} parent=35 // pred_check_branch
        %455 = sbr.rel (%p453) target = $region44
      $region43: #{tpu_custom_call.1} parent=35 // pred_region
        %v456 = vld [vmem:[#allocation3] sm:$0xff]
        %v457 = vrcp.pop %v456
        %v458 = vmul.f32 1.0, %v457
        %v459 = vld [vmem:[#allocation4] sm:$0xff]
        %461 = vset.pattern.permute.xlu0 0
        %462 = vperm.xlu0 %461, %v458
        %v463 = vpop.permute.xlu0 %462
        %v465 = vmul.f32 %v459, %v463
        %v466 = vld [vmem:[%s2] sm:$0xff]
        %v467 = vsub.f32 %v465, %v466
        %468 = vst.msk [vmem:[%s223] sm:$0xff] %vm257, %v467
      $region44: #{tpu_custom_call.1} parent=35 // pred_fallthru
        _
      %p469 = scmp.lt.s32.totalorder %s19, 1
      %s470 = scalar_select %p469, %s19, 1
      %s471 = smul.addr %s470, 8
      %s472 = scalar_lea.vmem %s4, %s471
      // Predicated region
      $region45: #{tpu_custom_call.1} parent=35 // pred_check
        %p473 = pneg %p136
      $region46: #{tpu_custom_call.1} parent=35 // pred_check_branch
        %475 = sbr.rel (%p473) target = $region48
      $region47: #{tpu_custom_call.1} parent=35 // pred_region
        _
      $region48: #{tpu_custom_call.1} parent=35 // pred_fallthru
        _
    $region36: #{tpu_custom_call.1} parent=5 // pred_fallthru
      _
    %p476 = scmp.le.s32.totalorder 2, %s10
    // Predicated region
    $region49: #{tpu_custom_call.1} parent=5 // pred_check
      %p477 = pneg %p476
    $region50: #{tpu_custom_call.1} parent=5 // pred_check_branch
      %479 = sbr.rel (%p477) target = $region52
    $region51: #{tpu_custom_call.1} parent=5 // pred_region
      %s480 = ssub.s32 %s10, 2
      // Predicated region
      $region53: #{tpu_custom_call.1} parent=51 // pred_check
        %p481 = pneg %p142
      $region54: #{tpu_custom_call.1} parent=51 // pred_check_branch
        %483 = sbr.rel (%p481) target = $region56
      $region55: #{tpu_custom_call.1} parent=51 // pred_region
        %p484 = scmp.lt.s32.totalorder %s21, 1
        %s485 = scalar_select %p484, %s21, 1
        %s486 = smul.addr %s485, 8
        %s487 = scalar_lea.vmem %s4, %s486
      $region56: #{tpu_custom_call.1} parent=51 // pred_fallthru
        _
    $region52: #{tpu_custom_call.1} parent=5 // pred_fallthru
      _
  $region6: #{tpu_custom_call.1} parent=0 // loop_footer
    %s14 = sadd.s32 1, %s10
  $region7: #{tpu_custom_call.1} parent=0 // loop_footer_branch
    %9 = sbr.rel target = $region3
  $region8: #{tpu_custom_call.1} parent=0 // loop_exit
    _

</llo_original>
